<compile_context>
chip_gen: v7x
topology: tpu7x:2x2x1
jax: 0.10.0
libtpu: 0.0.40
codegen_flags: <defaults>
</compile_context>

<pallas_src>
import functools

import jax
import jax.numpy as jnp
from jax.experimental import pallas as pl
from jax.experimental.pallas import tpu as pltpu


def cnn_layer_kernel(x_ref, w_ref, b_ref, o_ref):
    # x_ref: (TB, L_pad, D)  pre-masked, zero-padded input block
    # w_ref: (K*D, F)        tap-major im2col conv weight
    # b_ref: (1, F)          conv bias (f32)
    # o_ref: (TB, F)         tanh(max_t conv(x)[:, t, :] + b)
    TB, L_pad, D = x_ref.shape
    KD, Fout = w_ref.shape
    K = KD // D
    L_out = L_pad - K + 1

    # Layout ops (slices / concat / reshape) in f32; only the matmul operands
    # take the (optional) low-precision dtype of the weights.
    x = x_ref[...].astype(jnp.float32)                         # (TB, L_pad, D)
    # im2col: K shifted time-slices concatenated along the lane (feature) axis.
    lhs = jnp.concatenate([x[:, k:k + L_out, :] for k in range(K)], axis=-1)
    lhs = lhs.reshape(TB * L_out, KD).astype(w_ref.dtype)      # big-M MXU operand
    acc = jnp.dot(lhs, w_ref[...], preferred_element_type=jnp.float32)
    acc = acc.reshape(TB, L_out, Fout)                         # (TB, L_out, F) f32
    mx = jnp.max(acc, axis=1)                                  # max over time
    o_ref[...] = jnp.tanh(mx + b_ref[...]).astype(o_ref.dtype)


@functools.partial(
    jax.jit, static_argnames=("padding", "batch_block", "compute_dtype"))
def cnn_layer(x, mask, weight, bias, padding=1, batch_block=8,
              compute_dtype=None):
    """x: (B, L, D) f32, mask: (B, L) f32, weight: (F, D, K) torch layout, bias: (F,)."""
    B, L, D = x.shape
    Fout, Din, K = weight.shape
    assert Din == D
    L_pad = L + 2 * padding
    L_out = L_pad - K + 1
    assert L_out >= 1

    TB = min(batch_block, B)          # on v7x size TB against 64 MiB VMEM
    n_blk = pl.cdiv(B, TB)
    Bp = n_blk * TB

    # Mask multiply + (batch, time) zero-padding fuse into one XLA pass; the
    # time padding realizes Conv1d's padding=1, the batch padding rounds B up
    # to a multiple of the batch tile (padded rows are sliced off below).
    xm = x * mask[:, :, None]
    x_pad = jnp.pad(xm, ((0, Bp - B), (padding, padding), (0, 0)))
    # Weight: (F, D, K) torch layout -> tap-major (K*D, F) im2col RHS operand.
    w_im2col = jnp.transpose(weight, (2, 1, 0)).reshape(K * D, Fout)
    b2 = bias.astype(jnp.float32).reshape(1, Fout)

    if compute_dtype is not None:     # e.g. jnp.bfloat16 on v6e/v7x
        x_pad = x_pad.astype(compute_dtype)
        w_im2col = w_im2col.astype(compute_dtype)

    out = pl.pallas_call(
        cnn_layer_kernel,
        out_shape=jax.ShapeDtypeStruct((Bp, Fout), x.dtype),
        grid_spec=pltpu.PrefetchScalarGridSpec(
            num_scalar_prefetch=0,
            grid=(n_blk,),
            in_specs=[
                pl.BlockSpec((TB, L_pad, D), lambda b: (b, 0, 0)),
                pl.BlockSpec((K * D, Fout), lambda b: (0, 0)),
                pl.BlockSpec((1, Fout), lambda b: (0, 0)),
            ],
            out_specs=pl.BlockSpec((TB, Fout), lambda b: (b, 0)),
        ),
        # Batch-block axis is embarrassingly parallel -> shardable across the
        # two TensorCores on v7x whenever n_blk >= 2.
        compiler_params=pltpu.CompilerParams(
            dimension_semantics=("parallel",)),
    )(x_pad, w_im2col, b2)
    return out[:B]


def ref_cnn_layer(x, mask, weight, bias, padding=1):
    """Pure-JAX reference mirroring the PyTorch forward exactly."""
    xm = x * mask[:, :, None]                     # (B, L, D)
    xc = jnp.transpose(xm, (0, 2, 1))             # (B, D, L)  == permute(0,2,1)
    out = jax.lax.conv_general_dilated(
        xc, weight, window_strides=(1,), padding=[(padding, padding)],
        dimension_numbers=("NCH", "OIH", "NCH"))  # (B, F, L_out)
    out = out + bias[None, :, None]
    return jnp.tanh(jnp.max(out, axis=2))         # (B, F)


if __name__ == "__main__":
    # Small shapes consistent with the module: input_dim=16, num_filter=32,
    # kernel_size=3 ("tri_conv"), batch=2, seq_len=8.
    B, L, D, Fout, K = 2, 8, 16, 32, 3

    key = jax.random.PRNGKey(0)
    kx, km, kw, kb = jax.random.split(key, 4)
    x = jax.random.normal(kx, (B, L, D), dtype=jnp.float32)
    mask = (jax.random.uniform(km, (B, L)) > 0.25).astype(jnp.float32)
    # Deterministic synthetic parameters (Conv1d weight shape: (F, D, K)).
    weight = (0.1 * jax.random.normal(kw, (Fout, D, K))).astype(jnp.float32)
    bias = (0.1 * jax.random.normal(kb, (Fout,))).astype(jnp.float32)

    ref = ref_cnn_layer(x, mask, weight, bias)

    # Default f32 path: matches the conv reference to tight tolerance.
    out = jax.block_until_ready(cnn_layer(x, mask, weight, bias))
    assert out.shape == (B, Fout)
    assert jnp.allclose(out, ref, atol=1e-5, rtol=1e-5)

    # bf16 MXU-operand path (v6e/v7x optimization); accumulation stays f32,
    # so only matmul-operand rounding differs -> loose tolerance.
    out_bf16 = jax.block_until_ready(
        cnn_layer(x, mask, weight, bias, compute_dtype=jnp.bfloat16))
    assert jnp.allclose(out_bf16, ref, atol=5e-2, rtol=5e-2)

    print("KERNEL_OK")
</pallas_src>

<mosaic_0001>
module attributes {stable_mosaic.version = 11 : i64} {
  func.func @cnn_layer_kernel(%arg0: i32, %arg1: memref<2x10x16xf32, #tpu.memory_space<vmem>>, %arg2: memref<48x32xf32, #tpu.memory_space<vmem>>, %arg3: memref<1x32xf32, #tpu.memory_space<vmem>>, %arg4: memref<2x32xf32, #tpu.memory_space<vmem>>) attributes {dimension_semantics = [#tpu.dimension_semantics<parallel>], iteration_bounds = array<i64: 1>, scalar_prefetch = 0 : i64, scratch_operands = 0 : i64, tpu.core_type = #tpu.core_type<tc>, window_params = [{transform_indices = @transform_0, window_bounds = array<i64: 2, 10, 16>}, {pipeline_mode = #tpu.pipeline_mode<synchronous>, transform_indices = @transform_1, window_bounds = array<i64: 48, 32>}, {pipeline_mode = #tpu.pipeline_mode<synchronous>, transform_indices = @transform_2, window_bounds = array<i64: 1, 32>}, {transform_indices = @transform_3, window_bounds = array<i64: 2, 32>}]} {
    %c0 = arith.constant 0 : index
    %c0_0 = arith.constant 0 : index
    %c0_1 = arith.constant 0 : index
    %0 = vector.load %arg1[%c0, %c0_0, %c0_1] : memref<2x10x16xf32, #tpu.memory_space<vmem>>, vector<2x10x16xf32>
    %1 = vector.extract_strided_slice %0 {offsets = [0, 0, 0], sizes = [2, 8, 16], strides = [1, 1, 1]} : vector<2x10x16xf32> to vector<2x8x16xf32>
    %2 = vector.extract_strided_slice %0 {offsets = [0, 1, 0], sizes = [2, 8, 16], strides = [1, 1, 1]} : vector<2x10x16xf32> to vector<2x8x16xf32>
    %3 = vector.extract_strided_slice %0 {offsets = [0, 2, 0], sizes = [2, 8, 16], strides = [1, 1, 1]} : vector<2x10x16xf32> to vector<2x8x16xf32>
    %4 = tpu.concatenate %1, %2, %3 in 2 : vector<2x8x16xf32>, vector<2x8x16xf32>, vector<2x8x16xf32> -> vector<2x8x48xf32>
    %5 = vector.shape_cast %4 : vector<2x8x48xf32> to vector<16x48xf32>
    %c0_2 = arith.constant 0 : index
    %c0_3 = arith.constant 0 : index
    %6 = vector.load %arg2[%c0_2, %c0_3] : memref<48x32xf32, #tpu.memory_space<vmem>>, vector<48x32xf32>
    %cst = arith.constant dense<0.000000e+00> : vector<16x32xf32>
    %7 = tpu.matmul %5, %6, %cst {dimension_numbers = #tpu.dot_dimension_numbers<[1], [0], [0], [1], [0, 0, 1, 1], [], []>} : vector<16x48xf32>, vector<48x32xf32>, vector<16x32xf32> -> vector<16x32xf32>
    %8 = vector.shape_cast %7 : vector<16x32xf32> to vector<2x8x32xf32>
    %cst_4 = arith.constant dense<0xFF800000> : vector<2x32xf32>
    %9 = vector.multi_reduction <maximumf>, %8, %cst_4 [1] : vector<2x8x32xf32> to vector<2x32xf32>
    %c0_5 = arith.constant 0 : index
    %c0_6 = arith.constant 0 : index
    %10 = vector.load %arg3[%c0_5, %c0_6] : memref<1x32xf32, #tpu.memory_space<vmem>>, vector<1x32xf32>
    %11 = vector.broadcast %10 : vector<1x32xf32> to vector<2x32xf32>
    %12 = arith.addf %9, %11 : vector<2x32xf32>
    %13 = math.tanh %12 : vector<2x32xf32>
    %c0_7 = arith.constant 0 : index
    %c0_8 = arith.constant 0 : index
    %14 = vector.load %arg4[%c0_7, %c0_8] : memref<2x32xf32, #tpu.memory_space<vmem>>, vector<2x32xf32>
    tpu.vector_store %arg4[%c0_7, %c0_8], %13 {strides = array<i32>} : memref<2x32xf32, #tpu.memory_space<vmem>>, vector<2x32xf32>,
    return
  }
  func.func @transform_0(%arg0: i32) -> (i32, i32, i32) {
    %c0_i32 = arith.constant 0 : i32
    %c0_i32_0 = arith.constant 0 : i32
    %c0_i32_1 = arith.constant 0 : i32
    return %arg0, %c0_i32, %c0_i32_0 : i32, i32, i32
  }
  func.func @transform_1(%arg0: i32) -> (i32, i32) {
    %c0_i32 = arith.constant 0 : i32
    %c0_i32_0 = arith.constant 0 : i32
    %c0_i32_1 = arith.constant 0 : i32
    return %c0_i32, %c0_i32_0 : i32, i32
  }
  func.func @transform_2(%arg0: i32) -> (i32, i32) {
    %c0_i32 = arith.constant 0 : i32
    %c0_i32_0 = arith.constant 0 : i32
    %c0_i32_1 = arith.constant 0 : i32
    return %c0_i32, %c0_i32_0 : i32, i32
  }
  func.func @transform_3(%arg0: i32) -> (i32, i32) {
    %c0_i32 = arith.constant 0 : i32
    %c0_i32_0 = arith.constant 0 : i32
    return %arg0, %c0_i32 : i32, i32
  }
}

</mosaic_0001>

<llo_original>
// kernel: cnn_layer.1
$region0: #{cnn_layer.1}
  #allocation0 [shape = 'u32[]', space=smem, size = 0x4, offset = 0x4, fixed_abs, tag = 'smem constant byte address 0x4 - core index']
  #allocation1 [shape = 'u32[144,128]{1,0:T(1,128)}', space=vmem, size = 0x12000, scoped, tag = 'internal scratch']
  %s0 = inlined_call_operand.vmem [shape: f32[2,10,16], index: 0, kind: input, shape index: {}]
  %s1 = inlined_call_operand.vmem [shape: f32[48,32], index: 1, kind: input, shape index: {}]
  %s2 = inlined_call_operand.vmem [shape: f32[1,32], index: 2, kind: input, shape index: {}]
  %s3 = inlined_call_operand.hbm [shape: f32[2,32], index: 3, kind: output, shape index: {}]
  %s4 = sld [smem:[#allocation0]]
  $region22: #{cnn_layer.1} parent=0
    _
  %s6 = ssub.s32 1, %s4
  %s7 = scalar_select 0, %s6, %s4
  $region1: #{cnn_layer.1} parent=0
    #allocation2 [shape = 'u8[1024]{0}', space=vmem, size = 0x400, scoped, tag = 'output window, operand 0, single buffered']
    #allocation3 [shape = 's32[1]{0}', space=sflag, size = 0x4, scoped, tag = 'scoped memory for cnn_layer.1']
    %8 = vsyncpa [#allocation3], 0
    // Predicated region
    $region2: #{cnn_layer.1} parent=1 // pred_check
      _
    $region3: #{cnn_layer.1} parent=1 // pred_check_branch
      %10 = sbr.rel (0) target = $region5
    $region4: #{cnn_layer.1} parent=1 // pred_region
      _
    $region5: #{cnn_layer.1} parent=1 // pred_fallthru
      _
    // Predicated region
    $region6: #{cnn_layer.1} parent=1 // pred_check
      _
    $region7: #{cnn_layer.1} parent=1 // pred_check_branch
      %12 = sbr.rel (0) target = $region9
    $region8: #{cnn_layer.1} parent=1 // pred_region
      _
    $region9: #{cnn_layer.1} parent=1 // pred_fallthru
      _
    // Predicated region
    $region10: #{cnn_layer.1} parent=1 // pred_check
      _
    $region11: #{cnn_layer.1} parent=1 // pred_check_branch
      %14 = sbr.rel (0) target = $region13
    $region12: #{cnn_layer.1} parent=1 // pred_region
      _
    $region13: #{cnn_layer.1} parent=1 // pred_fallthru
      _
    %v15 = vld [vmem:[%s0] sm:$0xff]
    %v16 = vld [vmem:[%s0 + $0x8] sm:$0x3]
    %v17 = vld [vmem:[%s0 + $0x10] sm:$0xff]
    %v18 = vld [vmem:[%s0 + $0x18] sm:$0x3]
    %vm23 = vcmask 1046528
    %v24 = vrot.slane %v15, 1
    %v25 = vrot.slane %v16, 1
    %v26 = vsel %vm23, %v24, %v25
    %v27 = vrot.slane %v17, 1
    %v28 = vrot.slane %v18, 1
    %v29 = vsel %vm23, %v27, %v28
    %30 = vrot.lane.b32.xlu0 %v26, 16
    %v31 = vpop.permute.xlu0 %30
    %32 = vrot.lane.b32.xlu0 %v29, 16
    %v33 = vpop.permute.xlu0 %32
    %vm36 = vcmask 1045504
    %v37 = vrot.slane %v15, 2
    %v38 = vrot.slane %v16, 2
    %v39 = vsel %vm36, %v37, %v38
    %v40 = vrot.slane %v17, 2
    %v41 = vrot.slane %v18, 2
    %v42 = vsel %vm36, %v40, %v41
    %43 = vrot.lane.b32.xlu0 %v39, 32
    %v44 = vpop.permute.xlu0 %43
    %45 = vrot.lane.b32.xlu0 %v42, 32
    %v46 = vpop.permute.xlu0 %45
    %vm49 = vcmask 130048
    %v50 = vsel %vm49, %v15, %v31
    %v51 = vsel %vm49, %v17, %v33
    %vm52 = vcmask 261120
    %v53 = vsel %vm52, %v50, %v44
    %v54 = vsel %vm52, %v51, %v46
    %v55 = vld [vmem:[%s1] sm:$0xff]
    %v56 = vld [vmem:[%s1 + $0x8] sm:$0xff]
    %v57 = vld [vmem:[%s1 + $0x10] sm:$0xff]
    %v58 = vld [vmem:[%s1 + $0x18] sm:$0xff]
    %v59 = vld [vmem:[%s1 + $0x20] sm:$0xff]
    %v60 = vld [vmem:[%s1 + $0x28] sm:$0xff]
    %vm61 = vcmask 392192
    %v63 = vsel %vm61, %v53, 0
    %v66 = vsel %vm61, %v54, 0
    %68 = vmatprep.subr.mxu0 0.0
    %69 = vmatpush1.msra.mxu0 %v55
    %70 = vmatprep.subr.mxu0 0.0
    %71 = vmatpush1.msra.mxu0 %v56
    %72 = vmatprep.subr.mxu0 0.0
    %73 = vmatpush1.msra.mxu0 %v57
    %74 = vmatprep.subr.mxu0 0.0
    %75 = vmatpush1.msra.mxu0 %v58
    %76 = vmatprep.subr.mxu0 0.0
    %77 = vmatpush1.msra.mxu0 %v59
    %78 = vmatprep.subr.mxu0 0.0
    %79 = vmatpush1.msra.mxu0 %v60
    %80 = vmatprep.subr.mxu0 0.0
    %81 = vmatpush1.msra.mxu0 0.0
    %82 = vmatprep.subr.mxu0 0.0
    %83 = vmatpush1.msra.mxu0 0.0
    %84 = vmatprep.subr.mxu0 0.0
    %85 = vmatpush1.msra.mxu0 0.0
    %86 = vmatprep.subr.mxu0 0.0
    %87 = vmatpush1.msra.mxu0 0.0
    %88 = vmatprep.subr.mxu0 0.0
    %89 = vmatpush1.msra.mxu0 0.0
    %90 = vmatprep.subr.mxu0 0.0
    %91 = vmatpush1.msra.mxu0 0.0
    %92 = vmatprep.subr.mxu0 0.0
    %93 = vmatpush1.msra.mxu0 0.0
    %94 = vmatprep.subr.mxu0 0.0
    %95 = vmatpush1.msra.mxu0 0.0
    %96 = vmatprep.subr.mxu0 0.0
    %97 = vmatpush1.msra.mxu0 0.0
    %98 = vmatprep.subr.mxu0 0.0
    %99 = vmatpush1.msra.mxu0 0.0
    %100 = vmatprep.subr.mxu0 0.0
    %101 = vmatpush1.msra.mxu0 0.0
    %102 = vmatprep.subr.mxu0 0.0
    %103 = vmatpush1.msra.mxu0 0.0
    %104 = vmatprep.subr.mxu0 0.0
    %105 = vmatpush1.msra.mxu0 0.0
    %106 = vmatprep.subr.mxu0 0.0
    %107 = vmatpush1.msra.mxu0 0.0
    %108 = vmatprep.subr.mxu0 0.0
    %109 = vmatpush1.msra.mxu0 0.0
    %110 = vmatprep.subr.mxu0 0.0
    %111 = vmatpush1.msra.mxu0 0.0
    %112 = vmatprep.subr.mxu0 0.0
    %113 = vmatpush1.msra.mxu0 0.0
    %114 = vmatprep.subr.mxu0 0.0
    %115 = vmatpush1.msra.mxu0 0.0
    %116 = vmatprep.subr.mxu0 0.0
    %117 = vmatpush1.msra.mxu0 0.0
    %118 = vmatprep.subr.mxu0 0.0
    %119 = vmatpush1.msra.mxu0 0.0
    %120 = vmatprep.subr.mxu0 0.0
    %121 = vmatpush1.msra.mxu0 0.0
    %122 = vmatprep.subr.mxu0 0.0
    %123 = vmatpush1.msra.mxu0 0.0
    %124 = vmatprep.subr.mxu0 0.0
    %125 = vmatpush1.msra.mxu0 0.0
    %126 = vmatprep.subr.mxu0 0.0
    %127 = vmatpush1.msra.mxu0 0.0
    %128 = vmatprep.subr.mxu0 0.0
    %129 = vmatpush1.msra.mxu0 0.0
    %130 = vmatprep.subr.mxu0 0.0
    %131 = vmatpush1.msra.mxu0 0.0
    %132 = vmatprep.mubr.f32.mxu0 0.0
    %133 = vmatmul.mubr.f32.gmra.mrb[0].mxu0 %v63
    %v134 = vpop.f32.mrb[0].mxu0
    %v135 = vadd.f32 0.0, %v134
    %v136 = vpop.f32.mrb[0].mxu0
    %137 = vmatprep.mubr.f32.mxu0 0.0
    %138 = vmatmul.mubr.f32.gmra.mrb[0].mxu0 %v66
    %v139 = vpop.f32.mrb[0].mxu0
    %v140 = vadd.f32 0.0, %v139
    %v141 = vpop.f32.mrb[0].mxu0
    %142 = vdwg.mxu0
    %v143 = vsel %vm52, %v135, -inf
    %v144 = vrot.slane %v143, 4
    %v145 = vmax.f32 %v143, %v144
    %v146 = vrot.slane %v145, 2
    %v147 = vmax.f32 %v145, %v146
    %v148 = vrot.slane %v147, 1
    %v149 = vmax.f32 %v147, %v148
    %v150 = vsel %vm52, %v140, -inf
    %v151 = vrot.slane %v150, 4
    %v152 = vmax.f32 %v150, %v151
    %v153 = vrot.slane %v152, 2
    %v154 = vmax.f32 %v152, %v153
    %v155 = vrot.slane %v154, 1
    %v156 = vmax.f32 %v154, %v155
    %v157 = vld [vmem:[%s2] sm:$0x1]
    %v159 = vlaneseq
    %v160 = vshrl.u32 %v159, 7
    %v161 = vsub.s32 0, %v160
    %v162 = vrot.slane %v157, %v161
    %v164 = vadd.f32 %v149, %v162
    %v165 = vadd.f32 %v156, %v162
    %v166 = vtanh.pop %v164
    %v167 = vtanh.pop %v165
    %v170 = vrot.slane %v167, 7
    %vm171 = vcmask 1041409
    %v172 = vsel %vm171, %v170, %v166
    %vm174 = vcmask 254976
    %175 = vst.msk [vmem:[#allocation2] sm:$0x3] %vm174, %v172
    // Predicated region
    $region14: #{cnn_layer.1} parent=1 // pred_check
      _
    $region15: #{cnn_layer.1} parent=1 // pred_check_branch
      %177 = sbr.rel (0) target = $region17
    $region16: #{cnn_layer.1} parent=1 // pred_region
      %s179 = ssub.s32 32, 32
      %180 = vsyncadd [#allocation3], %s179
      %s182 = sshll.u32 [#allocation2], 4
      %s183 = int_to_ptr.vmem [resolvable:$true] %s182
      %185 = dma.vmem_to_hbm [thread:$0]  %s183, 32, %s3, [#allocation3]
    $region17: #{cnn_layer.1} parent=1 // pred_fallthru
      _
    // Predicated region
    $region18: #{cnn_layer.1} parent=1 // pred_check
      _
    $region19: #{cnn_layer.1} parent=1 // pred_check_branch
      %187 = sbr.rel (0) target = $region21
    $region20: #{cnn_layer.1} parent=1 // pred_region
      %188 = dma.done [#allocation3], 32
    $region21: #{cnn_layer.1} parent=1 // pred_fallthru
      _
    %189 = vsyncpa [#allocation3], 1

</llo_original>
